<compile_context>
chip_gen: v7x
topology: tpu7x:2x2x1
jax: 0.10.0
libtpu: 0.0.40
codegen_flags: <defaults>
</compile_context>

<pallas_src>
from functools import partial

import jax
import jax.numpy as jnp
import numpy as np
from jax.experimental import pallas as pl
from jax.experimental.pallas import tpu as pltpu


def lightconv_kernel(x_ref, wpw_ref, mw_ref, bias_ref, o_ref, *, W, k, sub_block):
    """One batch block per grid step; channels on sublanes, H*W on lanes.

    x_ref   : (B, Cin,  H*W)   input block (lane dense)
    wpw_ref : (Cin, Cout, 1)   point-wise weight, BN scale folded in
    mw_ref  : (k*k, Cout, H*W) depth-wise taps with BN scale AND border mask folded in
    bias_ref: (Cout, H*W)      dw_bias + pw_bias * sum_tap(mw)  (position dependent)
    o_ref   : (B, Cout, H*W)   output block (lane dense)
    """
    B, Cin, HW = x_ref.shape
    p = k // 2
    offs = [dh * W + dw for dh in range(-p, p + 1) for dw in range(-p, p + 1)]

    def compute(x):
        # --- point-wise 1x1 conv as Cin VPU broadcast-FMAs (init from first term) ---
        y = x[:, 0:1, :] * wpw_ref[0]
        for cin in range(1, Cin):
            y = y + x[:, cin:cin + 1, :] * wpw_ref[cin]
        # --- depth-wise kxk 'same' conv: lane-axis rolls * pre-masked tap weights ---
        acc = None
        for tap, off in enumerate(offs):
            # shifted[p] = y[p + off] (circular); wrapped lanes are zeroed by mw.
            shifted = pltpu.roll(y, (-off) % HW, 2) if off != 0 else y
            term = shifted * mw_ref[tap]
            acc = term if acc is None else acc + term
        # --- folded (dw_bias + masked pw_bias contribution) + ReLU ---
        return jnp.maximum(acc + bias_ref[...], 0.0)

    nsub = B // sub_block
    if nsub == 1:
        o_ref[...] = compute(x_ref[...])
    else:
        # Sub-chunk the batch so intermediates stay vreg-sized even for big blocks.
        def body(i, carry):
            b0 = pl.multiple_of(i * sub_block, sub_block)
            sl = pl.ds(b0, sub_block)
            o_ref[sl, :, :] = compute(x_ref[sl, :, :])
            return carry

        jax.lax.fori_loop(0, nsub, body, 0, unroll=(nsub <= 4))


def _chip_params():
    """(block_budget_bytes, vmem_limit_cap_bytes, num_tensorcores) per TPU generation."""
    try:
        kind = jax.devices()[0].device_kind.lower()
    except Exception:  # pragma: no cover - defensive
        kind = ""
    if ("v5 lite" in kind) or ("v5e" in kind) or ("v5lite" in kind):
        return 6 << 20, 48 << 20, 1        # v5e: 16 MiB scoped default, lowest HBM BW
    if "v7" in kind:
        return 20 << 20, 48 << 20, 2       # v7x: 64 MiB physical VMEM, 2 TCs
    if "v6" in kind:
        return 48 << 20, 100 << 20, 1      # v6e: roomy 128 MiB VMEM, 1 TC
    return 8 << 20, 64 << 20, 1


def _pick_batch_block(n, per_image_bytes, budget_bytes, fixed_bytes, num_tc):
    """Pick batch block (and batch padding) given a per-step VMEM budget."""
    avail = max(budget_bytes - fixed_bytes, per_image_bytes)
    max_b = min(n, max(1, avail // per_image_bytes))
    if num_tc >= 2 and n > 1:
        max_b = min(max_b, -(-n // 2))     # keep >= 2 parallel grid steps for megacore
    max_b = max(1, int(max_b))

    # Best exact divisor of n (no padding).
    div = next(b for b in range(max_b, 0, -1) if n % b == 0)
    div_steps = n // div
    # Padded alternative: full-size blocks (avoids batch_block=1 for awkward N, and
    # lets 2-TC chips get an even step count).
    pad_b = max_b
    pad_n = -(-n // pad_b) * pad_b
    pad_steps = pad_n // pad_b

    def score(steps, waste):
        odd_penalty = 1 if (num_tc >= 2 and n > 1 and steps % 2 == 1 and steps < 8) else 0
        return (steps + odd_penalty, waste)

    if score(pad_steps, pad_n - n) < score(div_steps, 0):
        return pad_b, pad_n - n
    return div, 0


def _largest_divisor_le(n, cap):
    for d in range(min(n, cap), 0, -1):
        if n % d == 0:
            return d
    return 1


def lightconv(x_nchw, wpw, pw_scale, pw_bias, wdw_taps, dw_scale, dw_bias, *,
              k, batch_block=None):
    """x_nchw: (N, Cin, H, W) f32 -> (N, Cout, H, W) f32. Eval-mode BN semantics."""
    N, Cin, H, W = x_nchw.shape
    Cout = wpw.shape[1]
    assert k % 2 == 1, "LightConv depthwise kernel assumes odd k ('same' padding)"
    HW = H * W
    p = k // 2

    # NCHW is already channels-on-sublanes / spatial-on-lanes: this reshape is free.
    x = x_nchw.reshape(N, Cin, HW).astype(jnp.float32)

    # --- fold eval-mode BN scales into the conv weights ------------------------------
    wpw_f = (wpw.astype(jnp.float32) * pw_scale[None, :])[:, :, None]        # (Cin, Cout, 1)
    wdw_f = wdw_taps.astype(jnp.float32) * dw_scale[None, :]                 # (k*k, Cout)

    # --- fold the zero-padding border masks into the depthwise tap weights -----------
    idx = jnp.arange(HW, dtype=jnp.int32)
    h_idx = idx // W
    w_idx = idx % W
    masks = []
    for dh in range(-p, p + 1):
        for dw in range(-p, p + 1):
            valid = ((h_idx + dh >= 0) & (h_idx + dh < H) &
                     (w_idx + dw >= 0) & (w_idx + dw < W))
            masks.append(valid)
    mask = jnp.stack(masks).astype(jnp.float32)                              # (k*k, HW)
    mw = wdw_f[:, :, None] * mask[:, None, :]                                # (k*k, Cout, HW)

    # --- fold pw_bias through the masked depthwise conv into a single bias map -------
    # Exact for zero-padded SAME conv: the pw-bias contribution at position p is
    # pw_bias[c] * (sum of in-bounds tap weights at p).
    bias_map = (dw_bias.astype(jnp.float32)[:, None] +
                pw_bias.astype(jnp.float32)[:, None] * jnp.sum(mw, axis=0))  # (Cout, HW)

    # --- generation-aware block picking & VMEM budgeting ------------------------------
    block_budget, vmem_cap, num_tc = _chip_params()
    per_image_bytes = (Cin + Cout) * HW * 4 * 2                # in+out, double-buffered
    const_bytes = (k * k * Cout * HW + Cout * HW + Cin * Cout) * 4 * 2
    max_sub = 8
    interm_bytes = 4 * max_sub * Cout * HW * 4                 # y, acc, roll temporaries
    fixed_bytes = const_bytes + interm_bytes

    if batch_block is None:
        batch_block, pad = _pick_batch_block(N, per_image_bytes, block_budget,
                                             fixed_bytes, num_tc)
    else:
        pad = (-N) % batch_block
    N_pad = N + pad
    if pad:
        x = jnp.pad(x, ((0, pad), (0, 0), (0, 0)))
    grid = (N_pad // batch_block,)

    sub_block = _largest_divisor_le(batch_block, max_sub)
    vmem_needed = batch_block * per_image_bytes + fixed_bytes
    vmem_limit = int(min(vmem_cap, max(32 << 20, 2 * vmem_needed)))

    kern = partial(lightconv_kernel, W=W, k=k, sub_block=sub_block)
    out = pl.pallas_call(
        kern,
        out_shape=jax.ShapeDtypeStruct((N_pad, Cout, HW), jnp.float32),
        grid_spec=pltpu.PrefetchScalarGridSpec(
            num_scalar_prefetch=0,
            grid=grid,
            in_specs=[
                pl.BlockSpec((batch_block, Cin, HW), lambda b: (b, 0, 0)),
                pl.BlockSpec((Cin, Cout, 1), lambda b: (0, 0, 0)),
                pl.BlockSpec((k * k, Cout, HW), lambda b: (0, 0, 0)),
                pl.BlockSpec((Cout, HW), lambda b: (0, 0)),
            ],
            out_specs=pl.BlockSpec((batch_block, Cout, HW), lambda b: (b, 0, 0)),
        ),
        compiler_params=pltpu.CompilerParams(
            dimension_semantics=("parallel",),
            vmem_limit_bytes=vmem_limit,
        ),
    )(x, wpw_f, mw, bias_map)

    return out[:N].reshape(N, Cout, H, W)  # free reshape back to NCHW


def fold_bn(gamma, beta, mean, var, eps=1e-5):
    """Fold eval-mode BatchNorm into per-channel scale/bias, shaped (C,)."""
    scale = gamma / jnp.sqrt(var + eps)
    bias = beta - mean * scale
    return scale, bias


def reference(x_nchw, wpw, pw_scale, pw_bias, wdw_taps, dw_scale, dw_bias, *, k):
    """Pure-JAX reference matching the PyTorch LightConv forward (eval mode)."""
    x = jnp.transpose(x_nchw, (0, 2, 3, 1))                        # NHWC
    y = jnp.einsum('nhwc,co->nhwo', x, wpw) * pw_scale + pw_bias
    Cout = y.shape[-1]
    w = wdw_taps.reshape(k, k, 1, Cout)                            # HWIO, depthwise
    z = jax.lax.conv_general_dilated(
        y, w, window_strides=(1, 1), padding='SAME',
        dimension_numbers=('NHWC', 'HWIO', 'NHWC'),
        feature_group_count=Cout)
    z = jnp.maximum(z * dw_scale + dw_bias, 0.0)
    return jnp.transpose(z, (0, 3, 1, 2))                          # NCHW


if __name__ == "__main__":
    # Small shapes consistent with the module: LightConv(in=4, out=8, kernel=3)
    N, Cin, Cout, H, W, K = 2, 4, 8, 16, 16, 3

    key = jax.random.PRNGKey(0)
    ks = jax.random.split(key, 11)

    x = jax.random.normal(ks[0], (N, Cin, H, W), jnp.float32)

    # Point-wise conv weight: PyTorch shape (Cout, Cin, 1, 1) -> stored as (Cin, Cout)
    wpw = jax.random.normal(ks[1], (Cin, Cout), jnp.float32) * 0.3
    # Depth-wise conv weight: PyTorch shape (Cout, 1, K, K) -> stored as (K*K, Cout)
    wdw_taps = (jax.random.normal(ks[2], (K, K, Cout), jnp.float32) * 0.3).reshape(K * K, Cout)

    # Deterministic BatchNorm parameters (eval-mode running stats)
    pw_gamma = 1.0 + 0.1 * jax.random.normal(ks[3], (Cout,), jnp.float32)
    pw_beta = 0.1 * jax.random.normal(ks[4], (Cout,), jnp.float32)
    pw_mean = 0.1 * jax.random.normal(ks[5], (Cout,), jnp.float32)
    pw_var = jax.random.uniform(ks[6], (Cout,), jnp.float32, 0.5, 1.5)
    dw_gamma = 1.0 + 0.1 * jax.random.normal(ks[7], (Cout,), jnp.float32)
    dw_beta = 0.1 * jax.random.normal(ks[8], (Cout,), jnp.float32)
    dw_mean = 0.1 * jax.random.normal(ks[9], (Cout,), jnp.float32)
    dw_var = jax.random.uniform(ks[10], (Cout,), jnp.float32, 0.5, 1.5)

    pw_scale, pw_bias = fold_bn(pw_gamma, pw_beta, pw_mean, pw_var)
    dw_scale, dw_bias = fold_bn(dw_gamma, dw_beta, dw_mean, dw_var)

    out = lightconv(x, wpw, pw_scale, pw_bias, wdw_taps, dw_scale, dw_bias, k=K)
    out = jax.block_until_ready(out)

    ref = reference(x, wpw, pw_scale, pw_bias, wdw_taps, dw_scale, dw_bias, k=K)
    np.testing.assert_allclose(np.asarray(out), np.asarray(ref), rtol=1e-4, atol=1e-4)

    print("KERNEL_OK")
</pallas_src>

<mosaic_0001>
module attributes {stable_mosaic.version = 11 : i64} {
  func.func @lightconv_kernel(%arg0: i32, %arg1: memref<2x4x256xf32, #tpu.memory_space<vmem>>, %arg2: memref<4x8x1xf32, #tpu.memory_space<vmem>>, %arg3: memref<9x8x256xf32, #tpu.memory_space<vmem>>, %arg4: memref<8x256xf32, #tpu.memory_space<vmem>>, %arg5: memref<2x8x256xf32, #tpu.memory_space<vmem>>) attributes {dimension_semantics = [#tpu.dimension_semantics<parallel>], iteration_bounds = array<i64: 1>, scalar_prefetch = 0 : i64, scratch_operands = 0 : i64, tpu.core_type = #tpu.core_type<tc>, window_params = [{transform_indices = @transform_0, window_bounds = array<i64: 2, 4, 256>}, {pipeline_mode = #tpu.pipeline_mode<synchronous>, transform_indices = @transform_1, window_bounds = array<i64: 4, 8, 1>}, {pipeline_mode = #tpu.pipeline_mode<synchronous>, transform_indices = @transform_2, window_bounds = array<i64: 9, 8, 256>}, {pipeline_mode = #tpu.pipeline_mode<synchronous>, transform_indices = @transform_3, window_bounds = array<i64: 8, 256>}, {transform_indices = @transform_4, window_bounds = array<i64: 2, 8, 256>}]} {
    %c0 = arith.constant 0 : index
    %c0_0 = arith.constant 0 : index
    %c0_1 = arith.constant 0 : index
    %0 = vector.load %arg1[%c0, %c0_0, %c0_1] : memref<2x4x256xf32, #tpu.memory_space<vmem>>, vector<2x4x256xf32>
    %1 = vector.extract_strided_slice %0 {offsets = [0, 0, 0], sizes = [2, 1, 256], strides = [1, 1, 1]} : vector<2x4x256xf32> to vector<2x1x256xf32>
    %c0_2 = arith.constant 0 : index
    %c0_3 = arith.constant 0 : index
    %c0_4 = arith.constant 0 : index
    %2 = vector.load %arg2[%c0_2, %c0_3, %c0_4] : memref<4x8x1xf32, #tpu.memory_space<vmem>>, vector<1x8x1xf32>
    %3 = vector.shape_cast %2 : vector<1x8x1xf32> to vector<8x1xf32>
    %4 = vector.shape_cast %3 : vector<8x1xf32> to vector<1x8x1xf32>
    %5 = vector.broadcast %1 : vector<2x1x256xf32> to vector<2x8x256xf32>
    %6 = vector.broadcast %4 : vector<1x8x1xf32> to vector<2x8x256xf32>
    %7 = arith.mulf %5, %6 : vector<2x8x256xf32>
    %8 = vector.extract_strided_slice %0 {offsets = [0, 1, 0], sizes = [2, 1, 256], strides = [1, 1, 1]} : vector<2x4x256xf32> to vector<2x1x256xf32>
    %c1 = arith.constant 1 : index
    %c0_5 = arith.constant 0 : index
    %c0_6 = arith.constant 0 : index
    %9 = vector.load %arg2[%c1, %c0_5, %c0_6] : memref<4x8x1xf32, #tpu.memory_space<vmem>>, vector<1x8x1xf32>
    %10 = vector.shape_cast %9 : vector<1x8x1xf32> to vector<8x1xf32>
    %11 = vector.shape_cast %10 : vector<8x1xf32> to vector<1x8x1xf32>
    %12 = vector.broadcast %8 : vector<2x1x256xf32> to vector<2x8x256xf32>
    %13 = vector.broadcast %11 : vector<1x8x1xf32> to vector<2x8x256xf32>
    %14 = arith.mulf %12, %13 : vector<2x8x256xf32>
    %15 = arith.addf %7, %14 : vector<2x8x256xf32>
    %16 = vector.extract_strided_slice %0 {offsets = [0, 2, 0], sizes = [2, 1, 256], strides = [1, 1, 1]} : vector<2x4x256xf32> to vector<2x1x256xf32>
    %c2 = arith.constant 2 : index
    %c0_7 = arith.constant 0 : index
    %c0_8 = arith.constant 0 : index
    %17 = vector.load %arg2[%c2, %c0_7, %c0_8] : memref<4x8x1xf32, #tpu.memory_space<vmem>>, vector<1x8x1xf32>
    %18 = vector.shape_cast %17 : vector<1x8x1xf32> to vector<8x1xf32>
    %19 = vector.shape_cast %18 : vector<8x1xf32> to vector<1x8x1xf32>
    %20 = vector.broadcast %16 : vector<2x1x256xf32> to vector<2x8x256xf32>
    %21 = vector.broadcast %19 : vector<1x8x1xf32> to vector<2x8x256xf32>
    %22 = arith.mulf %20, %21 : vector<2x8x256xf32>
    %23 = arith.addf %15, %22 : vector<2x8x256xf32>
    %24 = vector.extract_strided_slice %0 {offsets = [0, 3, 0], sizes = [2, 1, 256], strides = [1, 1, 1]} : vector<2x4x256xf32> to vector<2x1x256xf32>
    %c3 = arith.constant 3 : index
    %c0_9 = arith.constant 0 : index
    %c0_10 = arith.constant 0 : index
    %25 = vector.load %arg2[%c3, %c0_9, %c0_10] : memref<4x8x1xf32, #tpu.memory_space<vmem>>, vector<1x8x1xf32>
    %26 = vector.shape_cast %25 : vector<1x8x1xf32> to vector<8x1xf32>
    %27 = vector.shape_cast %26 : vector<8x1xf32> to vector<1x8x1xf32>
    %28 = vector.broadcast %24 : vector<2x1x256xf32> to vector<2x8x256xf32>
    %29 = vector.broadcast %27 : vector<1x8x1xf32> to vector<2x8x256xf32>
    %30 = arith.mulf %28, %29 : vector<2x8x256xf32>
    %31 = arith.addf %23, %30 : vector<2x8x256xf32>
    %c17_i32 = arith.constant 17 : i32
    %32 = tpu.dynamic_rotate %31 by %c17_i32 dim 2 : vector<2x8x256xf32>, i32 -> vector<2x8x256xf32>
    %c0_11 = arith.constant 0 : index
    %c0_12 = arith.constant 0 : index
    %c0_13 = arith.constant 0 : index
    %33 = vector.load %arg3[%c0_11, %c0_12, %c0_13] : memref<9x8x256xf32, #tpu.memory_space<vmem>>, vector<1x8x256xf32>
    %34 = vector.shape_cast %33 : vector<1x8x256xf32> to vector<8x256xf32>
    %35 = vector.shape_cast %34 : vector<8x256xf32> to vector<1x8x256xf32>
    %36 = vector.broadcast %35 : vector<1x8x256xf32> to vector<2x8x256xf32>
    %37 = arith.mulf %32, %36 : vector<2x8x256xf32>
    %c16_i32 = arith.constant 16 : i32
    %38 = tpu.dynamic_rotate %31 by %c16_i32 dim 2 : vector<2x8x256xf32>, i32 -> vector<2x8x256xf32>
    %c1_14 = arith.constant 1 : index
    %c0_15 = arith.constant 0 : index
    %c0_16 = arith.constant 0 : index
    %39 = vector.load %arg3[%c1_14, %c0_15, %c0_16] : memref<9x8x256xf32, #tpu.memory_space<vmem>>, vector<1x8x256xf32>
    %40 = vector.shape_cast %39 : vector<1x8x256xf32> to vector<8x256xf32>
    %41 = vector.shape_cast %40 : vector<8x256xf32> to vector<1x8x256xf32>
    %42 = vector.broadcast %41 : vector<1x8x256xf32> to vector<2x8x256xf32>
    %43 = arith.mulf %38, %42 : vector<2x8x256xf32>
    %44 = arith.addf %37, %43 : vector<2x8x256xf32>
    %c15_i32 = arith.constant 15 : i32
    %45 = tpu.dynamic_rotate %31 by %c15_i32 dim 2 : vector<2x8x256xf32>, i32 -> vector<2x8x256xf32>
    %c2_17 = arith.constant 2 : index
    %c0_18 = arith.constant 0 : index
    %c0_19 = arith.constant 0 : index
    %46 = vector.load %arg3[%c2_17, %c0_18, %c0_19] : memref<9x8x256xf32, #tpu.memory_space<vmem>>, vector<1x8x256xf32>
    %47 = vector.shape_cast %46 : vector<1x8x256xf32> to vector<8x256xf32>
    %48 = vector.shape_cast %47 : vector<8x256xf32> to vector<1x8x256xf32>
    %49 = vector.broadcast %48 : vector<1x8x256xf32> to vector<2x8x256xf32>
    %50 = arith.mulf %45, %49 : vector<2x8x256xf32>
    %51 = arith.addf %44, %50 : vector<2x8x256xf32>
    %c1_i32 = arith.constant 1 : i32
    %52 = tpu.dynamic_rotate %31 by %c1_i32 dim 2 : vector<2x8x256xf32>, i32 -> vector<2x8x256xf32>
    %c3_20 = arith.constant 3 : index
    %c0_21 = arith.constant 0 : index
    %c0_22 = arith.constant 0 : index
    %53 = vector.load %arg3[%c3_20, %c0_21, %c0_22] : memref<9x8x256xf32, #tpu.memory_space<vmem>>, vector<1x8x256xf32>
    %54 = vector.shape_cast %53 : vector<1x8x256xf32> to vector<8x256xf32>
    %55 = vector.shape_cast %54 : vector<8x256xf32> to vector<1x8x256xf32>
    %56 = vector.broadcast %55 : vector<1x8x256xf32> to vector<2x8x256xf32>
    %57 = arith.mulf %52, %56 : vector<2x8x256xf32>
    %58 = arith.addf %51, %57 : vector<2x8x256xf32>
    %c4 = arith.constant 4 : index
    %c0_23 = arith.constant 0 : index
    %c0_24 = arith.constant 0 : index
    %59 = vector.load %arg3[%c4, %c0_23, %c0_24] : memref<9x8x256xf32, #tpu.memory_space<vmem>>, vector<1x8x256xf32>
    %60 = vector.shape_cast %59 : vector<1x8x256xf32> to vector<8x256xf32>
    %61 = vector.shape_cast %60 : vector<8x256xf32> to vector<1x8x256xf32>
    %62 = vector.broadcast %61 : vector<1x8x256xf32> to vector<2x8x256xf32>
    %63 = arith.mulf %31, %62 : vector<2x8x256xf32>
    %64 = arith.addf %58, %63 : vector<2x8x256xf32>
    %c255_i32 = arith.constant 255 : i32
    %65 = tpu.dynamic_rotate %31 by %c255_i32 dim 2 : vector<2x8x256xf32>, i32 -> vector<2x8x256xf32>
    %c5 = arith.constant 5 : index
    %c0_25 = arith.constant 0 : index
    %c0_26 = arith.constant 0 : index
    %66 = vector.load %arg3[%c5, %c0_25, %c0_26] : memref<9x8x256xf32, #tpu.memory_space<vmem>>, vector<1x8x256xf32>
    %67 = vector.shape_cast %66 : vector<1x8x256xf32> to vector<8x256xf32>
    %68 = vector.shape_cast %67 : vector<8x256xf32> to vector<1x8x256xf32>
    %69 = vector.broadcast %68 : vector<1x8x256xf32> to vector<2x8x256xf32>
    %70 = arith.mulf %65, %69 : vector<2x8x256xf32>
    %71 = arith.addf %64, %70 : vector<2x8x256xf32>
    %c241_i32 = arith.constant 241 : i32
    %72 = tpu.dynamic_rotate %31 by %c241_i32 dim 2 : vector<2x8x256xf32>, i32 -> vector<2x8x256xf32>
    %c6 = arith.constant 6 : index
    %c0_27 = arith.constant 0 : index
    %c0_28 = arith.constant 0 : index
    %73 = vector.load %arg3[%c6, %c0_27, %c0_28] : memref<9x8x256xf32, #tpu.memory_space<vmem>>, vector<1x8x256xf32>
    %74 = vector.shape_cast %73 : vector<1x8x256xf32> to vector<8x256xf32>
    %75 = vector.shape_cast %74 : vector<8x256xf32> to vector<1x8x256xf32>
    %76 = vector.broadcast %75 : vector<1x8x256xf32> to vector<2x8x256xf32>
    %77 = arith.mulf %72, %76 : vector<2x8x256xf32>
    %78 = arith.addf %71, %77 : vector<2x8x256xf32>
    %c240_i32 = arith.constant 240 : i32
    %79 = tpu.dynamic_rotate %31 by %c240_i32 dim 2 : vector<2x8x256xf32>, i32 -> vector<2x8x256xf32>
    %c7 = arith.constant 7 : index
    %c0_29 = arith.constant 0 : index
    %c0_30 = arith.constant 0 : index
    %80 = vector.load %arg3[%c7, %c0_29, %c0_30] : memref<9x8x256xf32, #tpu.memory_space<vmem>>, vector<1x8x256xf32>
    %81 = vector.shape_cast %80 : vector<1x8x256xf32> to vector<8x256xf32>
    %82 = vector.shape_cast %81 : vector<8x256xf32> to vector<1x8x256xf32>
    %83 = vector.broadcast %82 : vector<1x8x256xf32> to vector<2x8x256xf32>
    %84 = arith.mulf %79, %83 : vector<2x8x256xf32>
    %85 = arith.addf %78, %84 : vector<2x8x256xf32>
    %c239_i32 = arith.constant 239 : i32
    %86 = tpu.dynamic_rotate %31 by %c239_i32 dim 2 : vector<2x8x256xf32>, i32 -> vector<2x8x256xf32>
    %c8 = arith.constant 8 : index
    %c0_31 = arith.constant 0 : index
    %c0_32 = arith.constant 0 : index
    %87 = vector.load %arg3[%c8, %c0_31, %c0_32] : memref<9x8x256xf32, #tpu.memory_space<vmem>>, vector<1x8x256xf32>
    %88 = vector.shape_cast %87 : vector<1x8x256xf32> to vector<8x256xf32>
    %89 = vector.shape_cast %88 : vector<8x256xf32> to vector<1x8x256xf32>
    %90 = vector.broadcast %89 : vector<1x8x256xf32> to vector<2x8x256xf32>
    %91 = arith.mulf %86, %90 : vector<2x8x256xf32>
    %92 = arith.addf %85, %91 : vector<2x8x256xf32>
    %c0_33 = arith.constant 0 : index
    %c0_34 = arith.constant 0 : index
    %93 = vector.load %arg4[%c0_33, %c0_34] : memref<8x256xf32, #tpu.memory_space<vmem>>, vector<8x256xf32>
    %94 = vector.shape_cast %93 : vector<8x256xf32> to vector<1x8x256xf32>
    %95 = vector.broadcast %94 : vector<1x8x256xf32> to vector<2x8x256xf32>
    %96 = arith.addf %92, %95 : vector<2x8x256xf32>
    %cst = arith.constant 0.000000e+00 : f32
    %97 = vector.broadcast %cst : f32 to vector<2x8x256xf32>
    %98 = arith.maximumf %96, %97 : vector<2x8x256xf32>
    %c0_35 = arith.constant 0 : index
    %c0_36 = arith.constant 0 : index
    %c0_37 = arith.constant 0 : index
    %99 = vector.load %arg5[%c0_35, %c0_36, %c0_37] : memref<2x8x256xf32, #tpu.memory_space<vmem>>, vector<2x8x256xf32>
    tpu.vector_store %arg5[%c0_35, %c0_36, %c0_37], %98 {strides = array<i32>} : memref<2x8x256xf32, #tpu.memory_space<vmem>>, vector<2x8x256xf32>,
    return
  }
  func.func @transform_0(%arg0: i32) -> (i32, i32, i32) {
    %c0_i32 = arith.constant 0 : i32
    %c0_i32_0 = arith.constant 0 : i32
    %c0_i32_1 = arith.constant 0 : i32
    return %arg0, %c0_i32, %c0_i32_0 : i32, i32, i32
  }
  func.func @transform_1(%arg0: i32) -> (i32, i32, i32) {
    %c0_i32 = arith.constant 0 : i32
    %c0_i32_0 = arith.constant 0 : i32
    %c0_i32_1 = arith.constant 0 : i32
    %c0_i32_2 = arith.constant 0 : i32
    return %c0_i32, %c0_i32_0, %c0_i32_1 : i32, i32, i32
  }
  func.func @transform_2(%arg0: i32) -> (i32, i32, i32) {
    %c0_i32 = arith.constant 0 : i32
    %c0_i32_0 = arith.constant 0 : i32
    %c0_i32_1 = arith.constant 0 : i32
    %c0_i32_2 = arith.constant 0 : i32
    return %c0_i32, %c0_i32_0, %c0_i32_1 : i32, i32, i32
  }
  func.func @transform_3(%arg0: i32) -> (i32, i32) {
    %c0_i32 = arith.constant 0 : i32
    %c0_i32_0 = arith.constant 0 : i32
    %c0_i32_1 = arith.constant 0 : i32
    return %c0_i32, %c0_i32_0 : i32, i32
  }
  func.func @transform_4(%arg0: i32) -> (i32, i32, i32) {
    %c0_i32 = arith.constant 0 : i32
    %c0_i32_0 = arith.constant 0 : i32
    %c0_i32_1 = arith.constant 0 : i32
    return %arg0, %c0_i32, %c0_i32_0 : i32, i32, i32
  }
}

</mosaic_0001>

<llo_original>
// kernel: tpu_custom_call.1
$region0: #{tpu_custom_call.1}
  #allocation0 [shape = 'u32[]', space=smem, size = 0x4, offset = 0x4, fixed_abs, tag = 'smem constant byte address 0x4 - core index']
  #allocation1 [shape = 'u32[144,128]{1,0:T(1,128)}', space=vmem, size = 0x12000, scoped, tag = 'internal scratch']
  %s0 = inlined_call_operand.vmem [shape: f32[2,4,256], index: 0, kind: input, shape index: {}]
  %s1 = inlined_call_operand.vmem [shape: f32[4,8,1], index: 1, kind: input, shape index: {}]
  %s2 = inlined_call_operand.hbm [shape: f32[9,8,256], index: 2, kind: input, shape index: {}]
  %s3 = inlined_call_operand.vmem [shape: f32[8,256], index: 3, kind: input, shape index: {}]
  %s4 = inlined_call_operand.hbm [shape: f32[2,8,256], index: 4, kind: output, shape index: {}]
  %s5 = sld [smem:[#allocation0]]
  $region30: #{tpu_custom_call.1} parent=0
    _
  %s7 = ssub.s32 1, %s5
  %s8 = scalar_select 0, %s7, %s5
  $region1: #{tpu_custom_call.1} parent=0
    #allocation2 [shape = 'u8[73728]{0}', space=vmem, size = 0x12000, scoped, tag = 'input window, operand 2, single buffered']
    #allocation3 [shape = 's32[1]{0}', space=sflag, size = 0x4, scoped, tag = 'scoped memory for tpu_custom_call.1']
    #allocation4 [shape = 's32[1]{0}', space=sflag, size = 0x4, scoped, tag = 'scoped memory for tpu_custom_call.1']
    #allocation5 [shape = 'u8[16384]{0}', space=vmem, size = 0x4000, scoped, tag = 'output window, operand 0, single buffered']
    %9 = vsyncpa [#allocation3], 0
    %10 = vsyncpa [#allocation4], 0
    // Predicated region
    $region2: #{tpu_custom_call.1} parent=1 // pred_check
      _
    $region3: #{tpu_custom_call.1} parent=1 // pred_check_branch
      %12 = sbr.rel (0) target = $region5
    $region4: #{tpu_custom_call.1} parent=1 // pred_region
      _
    $region5: #{tpu_custom_call.1} parent=1 // pred_fallthru
      _
    // Predicated region
    $region6: #{tpu_custom_call.1} parent=1 // pred_check
      _
    $region7: #{tpu_custom_call.1} parent=1 // pred_check_branch
      %14 = sbr.rel (0) target = $region9
    $region8: #{tpu_custom_call.1} parent=1 // pred_region
      _
    $region9: #{tpu_custom_call.1} parent=1 // pred_fallthru
      _
    // Predicated region
    $region10: #{tpu_custom_call.1} parent=1 // pred_check
      _
    $region11: #{tpu_custom_call.1} parent=1 // pred_check_branch
      %16 = sbr.rel (0) target = $region13
    $region12: #{tpu_custom_call.1} parent=1 // pred_region
      %s18 = ssub.s32 2304, 2304
      %19 = vsyncadd [#allocation3], %s18
      %s20 = sshll.u32 [#allocation2], 4
      %s21 = int_to_ptr.vmem [resolvable:$true] %s20
      %26 = dma.hbm_to_vmem [thread:$0]  %s2, 2304, %s21, [#allocation3], 256, 256, 16
    $region13: #{tpu_custom_call.1} parent=1 // pred_fallthru
      _
    // Predicated region
    $region14: #{tpu_custom_call.1} parent=1 // pred_check
      _
    $region15: #{tpu_custom_call.1} parent=1 // pred_check_branch
      %28 = sbr.rel (0) target = $region17
    $region16: #{tpu_custom_call.1} parent=1 // pred_region
      _
    $region17: #{tpu_custom_call.1} parent=1 // pred_fallthru
      _
    // Predicated region
    $region18: #{tpu_custom_call.1} parent=1 // pred_check
      _
    $region19: #{tpu_custom_call.1} parent=1 // pred_check_branch
      %30 = sbr.rel (0) target = $region21
    $region20: #{tpu_custom_call.1} parent=1 // pred_region
      %31 = dma.done [#allocation3], 2304
    $region21: #{tpu_custom_call.1} parent=1 // pred_fallthru
      _
    %v32 = vld [vmem:[%s0] sm:$0xff]
    %v33 = vld [vmem:[%s0 + $0x8] sm:$0xff]
    %v34 = vld [vmem:[%s1] sm:$0xff]
    %v37 = vlaneseq
    %v38 = vshrl.u32 %v37, 7
    %v39 = vsub.s32 0, %v38
    %v40 = vrot.slane %v32, %v39
    %v41 = vlaneseq
    %v42 = vshrl.u32 %v41, 7
    %v43 = vsub.s32 4, %v42
    %v44 = vrot.slane %v32, %v43
    %v45 = vlaneseq
    %v46 = vshrl.u32 %v45, 7
    %v47 = vsub.s32 0, %v46
    %v48 = vrot.slane %v33, %v47
    %v49 = vlaneseq
    %v50 = vshrl.u32 %v49, 7
    %v51 = vsub.s32 4, %v50
    %v52 = vrot.slane %v33, %v51
    %v57 = vlaneseq
    %v58 = vshrl.u32 %v57, 7
    %v59 = vsub.s32 0, %v58
    %v60 = vrot.slane %v40, %v59
    %v61 = vlaneseq
    %v62 = vshrl.u32 %v61, 7
    %v63 = vsub.s32 0, %v62
    %v64 = vrot.slane %v44, %v63
    %v65 = vlaneseq
    %v66 = vshrl.u32 %v65, 7
    %v67 = vsub.s32 0, %v66
    %v68 = vrot.slane %v48, %v67
    %v69 = vlaneseq
    %v70 = vshrl.u32 %v69, 7
    %v71 = vsub.s32 0, %v70
    %v72 = vrot.slane %v52, %v71
    %74 = vset.pattern.permute.xlu0 0
    %75 = vperm.xlu0 %74, %v34
    %v76 = vpop.permute.xlu0 %75
    %v78 = vmul.f32 %v60, %v76
    %v79 = vmul.f32 %v64, %v76
    %v80 = vmul.f32 %v68, %v76
    %v81 = vmul.f32 %v72, %v76
    %s82 = scalar_lea.vmem %s1, 8
    %v83 = vld [vmem:[%s82] sm:$0xff]
    %v84 = vlaneseq
    %v85 = vshrl.u32 %v84, 7
    %v86 = vsub.s32 1, %v85
    %v87 = vrot.slane %v32, %v86
    %v88 = vlaneseq
    %v89 = vshrl.u32 %v88, 7
    %v90 = vsub.s32 5, %v89
    %v91 = vrot.slane %v32, %v90
    %v92 = vlaneseq
    %v93 = vshrl.u32 %v92, 7
    %v94 = vsub.s32 1, %v93
    %v95 = vrot.slane %v33, %v94
    %v96 = vlaneseq
    %v97 = vshrl.u32 %v96, 7
    %v98 = vsub.s32 5, %v97
    %v99 = vrot.slane %v33, %v98
    %v104 = vlaneseq
    %v105 = vshrl.u32 %v104, 7
    %v106 = vsub.s32 1, %v105
    %v107 = vrot.slane %v87, %v106
    %v108 = vlaneseq
    %v109 = vshrl.u32 %v108, 7
    %v110 = vsub.s32 1, %v109
    %v111 = vrot.slane %v91, %v110
    %v112 = vlaneseq
    %v113 = vshrl.u32 %v112, 7
    %v114 = vsub.s32 1, %v113
    %v115 = vrot.slane %v95, %v114
    %v116 = vlaneseq
    %v117 = vshrl.u32 %v116, 7
    %v118 = vsub.s32 1, %v117
    %v119 = vrot.slane %v99, %v118
    %121 = vset.pattern.permute.xlu0 0
    %122 = vperm.xlu0 %121, %v83
    %v123 = vpop.permute.xlu0 %122
    %v125 = vmul.f32 %v107, %v123
    %v126 = vmul.f32 %v111, %v123
    %v127 = vmul.f32 %v115, %v123
    %v128 = vmul.f32 %v119, %v123
    %v129 = vadd.f32 %v78, %v125
    %v130 = vadd.f32 %v79, %v126
    %v131 = vadd.f32 %v80, %v127
    %v132 = vadd.f32 %v81, %v128
    %s133 = scalar_lea.vmem %s1, 16
    %v134 = vld [vmem:[%s133] sm:$0xff]
    %v135 = vlaneseq
    %v136 = vshrl.u32 %v135, 7
    %v137 = vsub.s32 2, %v136
    %v138 = vrot.slane %v32, %v137
    %v139 = vlaneseq
    %v140 = vshrl.u32 %v139, 7
    %v141 = vsub.s32 6, %v140
    %v142 = vrot.slane %v32, %v141
    %v143 = vlaneseq
    %v144 = vshrl.u32 %v143, 7
    %v145 = vsub.s32 2, %v144
    %v146 = vrot.slane %v33, %v145
    %v147 = vlaneseq
    %v148 = vshrl.u32 %v147, 7
    %v149 = vsub.s32 6, %v148
    %v150 = vrot.slane %v33, %v149
    %v155 = vlaneseq
    %v156 = vshrl.u32 %v155, 7
    %v157 = vsub.s32 2, %v156
    %v158 = vrot.slane %v138, %v157
    %v159 = vlaneseq
    %v160 = vshrl.u32 %v159, 7
    %v161 = vsub.s32 2, %v160
    %v162 = vrot.slane %v142, %v161
    %v163 = vlaneseq
    %v164 = vshrl.u32 %v163, 7
    %v165 = vsub.s32 2, %v164
    %v166 = vrot.slane %v146, %v165
    %v167 = vlaneseq
    %v168 = vshrl.u32 %v167, 7
    %v169 = vsub.s32 2, %v168
    %v170 = vrot.slane %v150, %v169
    %172 = vset.pattern.permute.xlu0 0
    %173 = vperm.xlu0 %172, %v134
    %v174 = vpop.permute.xlu0 %173
    %v176 = vmul.f32 %v158, %v174
    %v177 = vmul.f32 %v162, %v174
    %v178 = vmul.f32 %v166, %v174
    %v179 = vmul.f32 %v170, %v174
    %v180 = vadd.f32 %v129, %v176
    %v181 = vadd.f32 %v130, %v177
    %v182 = vadd.f32 %v131, %v178
    %v183 = vadd.f32 %v132, %v179
    %s184 = scalar_lea.vmem %s1, 24
    %v185 = vld [vmem:[%s184] sm:$0xff]
    %v186 = vlaneseq
    %v187 = vshrl.u32 %v186, 7
    %v188 = vsub.s32 3, %v187
    %v189 = vrot.slane %v32, %v188
    %v190 = vlaneseq
    %v191 = vshrl.u32 %v190, 7
    %v192 = vsub.s32 7, %v191
    %v193 = vrot.slane %v32, %v192
    %v194 = vlaneseq
    %v195 = vshrl.u32 %v194, 7
    %v196 = vsub.s32 3, %v195
    %v197 = vrot.slane %v33, %v196
    %v198 = vlaneseq
    %v199 = vshrl.u32 %v198, 7
    %v200 = vsub.s32 7, %v199
    %v201 = vrot.slane %v33, %v200
    %v206 = vlaneseq
    %v207 = vshrl.u32 %v206, 7
    %v208 = vsub.s32 3, %v207
    %v209 = vrot.slane %v189, %v208
    %v210 = vlaneseq
    %v211 = vshrl.u32 %v210, 7
    %v212 = vsub.s32 3, %v211
    %v213 = vrot.slane %v193, %v212
    %v214 = vlaneseq
    %v215 = vshrl.u32 %v214, 7
    %v216 = vsub.s32 3, %v215
    %v217 = vrot.slane %v197, %v216
    %v218 = vlaneseq
    %v219 = vshrl.u32 %v218, 7
    %v220 = vsub.s32 3, %v219
    %v221 = vrot.slane %v201, %v220
    %223 = vset.pattern.permute.xlu0 0
    %224 = vperm.xlu0 %223, %v185
    %v225 = vpop.permute.xlu0 %224
    %v227 = vmul.f32 %v209, %v225
    %v228 = vmul.f32 %v213, %v225
    %v229 = vmul.f32 %v217, %v225
    %v230 = vmul.f32 %v221, %v225
    %v231 = vadd.f32 %v180, %v227
    %v232 = vadd.f32 %v181, %v228
    %v233 = vadd.f32 %v182, %v229
    %v234 = vadd.f32 %v183, %v230
    %235 = vrot.lane.b32.xlu0 %v231, 17
    %v236 = vpop.permute.xlu0 %235
    %237 = vrot.lane.b32.xlu0 %v233, 17
    %v238 = vpop.permute.xlu0 %237
    %239 = vrot.lane.b32.xlu0 %v232, 17
    %v240 = vpop.permute.xlu0 %239
    %241 = vrot.lane.b32.xlu0 %v234, 17
    %v242 = vpop.permute.xlu0 %241
    %v243 = vlaneseq
    %v244 = vand.u32 %v243, 127
    %vm245 = vcmp.lt.s32.totalorder %v244, 17
    %v246 = vsel %vm245, %v236, %v240
    %v247 = vsel %vm245, %v238, %v242
    %v248 = vsel %vm245, %v240, %v236
    %v249 = vsel %vm245, %v242, %v238
    %v250 = vld [vmem:[#allocation2] sm:$0xff]
    %v251 = vld [vmem:[#allocation2 + $0x8] sm:$0xff]
    %v252 = vmul.f32 %v248, %v250
    %v253 = vmul.f32 %v246, %v251
    %v254 = vmul.f32 %v249, %v250
    %v255 = vmul.f32 %v247, %v251
    %256 = vrot.lane.b32.xlu0 %v231, 16
    %v257 = vpop.permute.xlu0 %256
    %258 = vrot.lane.b32.xlu0 %v233, 16
    %v259 = vpop.permute.xlu0 %258
    %260 = vrot.lane.b32.xlu0 %v232, 16
    %v261 = vpop.permute.xlu0 %260
    %262 = vrot.lane.b32.xlu0 %v234, 16
    %v263 = vpop.permute.xlu0 %262
    %vm264 = vcmp.lt.s32.totalorder %v244, 16
    %v265 = vsel %vm264, %v257, %v261
    %v266 = vsel %vm264, %v259, %v263
    %v267 = vsel %vm264, %v261, %v257
    %v268 = vsel %vm264, %v263, %v259
    %s269 = scalar_lea.vmem [#allocation2], 16
    %v270 = vld [vmem:[%s269] sm:$0xff]
    %v271 = vld [vmem:[%s269 + $0x8] sm:$0xff]
    %v272 = vmul.f32 %v267, %v270
    %v273 = vmul.f32 %v265, %v271
    %v274 = vmul.f32 %v268, %v270
    %v275 = vmul.f32 %v266, %v271
    %v276 = vadd.f32 %v252, %v272
    %v277 = vadd.f32 %v253, %v273
    %v278 = vadd.f32 %v254, %v274
    %v279 = vadd.f32 %v255, %v275
    %280 = vrot.lane.b32.xlu0 %v231, 15
    %v281 = vpop.permute.xlu0 %280
    %282 = vrot.lane.b32.xlu0 %v233, 15
    %v283 = vpop.permute.xlu0 %282
    %284 = vrot.lane.b32.xlu0 %v232, 15
    %v285 = vpop.permute.xlu0 %284
    %286 = vrot.lane.b32.xlu0 %v234, 15
    %v287 = vpop.permute.xlu0 %286
    %vm288 = vcmp.lt.s32.totalorder %v244, 15
    %v289 = vsel %vm288, %v281, %v285
    %v290 = vsel %vm288, %v283, %v287
    %v291 = vsel %vm288, %v285, %v281
    %v292 = vsel %vm288, %v287, %v283
    %s293 = scalar_lea.vmem [#allocation2], 32
    %v294 = vld [vmem:[%s293] sm:$0xff]
    %v295 = vld [vmem:[%s293 + $0x8] sm:$0xff]
    %v296 = vmul.f32 %v291, %v294
    %v297 = vmul.f32 %v289, %v295
    %v298 = vmul.f32 %v292, %v294
    %v299 = vmul.f32 %v290, %v295
    %v300 = vadd.f32 %v276, %v296
    %v301 = vadd.f32 %v277, %v297
    %v302 = vadd.f32 %v278, %v298
    %v303 = vadd.f32 %v279, %v299
    %304 = vrot.lane.b32.xlu0 %v231, 1
    %v305 = vpop.permute.xlu0 %304
    %306 = vrot.lane.b32.xlu0 %v233, 1
    %v307 = vpop.permute.xlu0 %306
    %308 = vrot.lane.b32.xlu0 %v232, 1
    %v309 = vpop.permute.xlu0 %308
    %310 = vrot.lane.b32.xlu0 %v234, 1
    %v311 = vpop.permute.xlu0 %310
    %vm312 = vcmp.lt.s32.totalorder %v244, 1
    %v313 = vsel %vm312, %v305, %v309
    %v314 = vsel %vm312, %v307, %v311
    %v315 = vsel %vm312, %v309, %v305
    %v316 = vsel %vm312, %v311, %v307
    %s317 = scalar_lea.vmem [#allocation2], 48
    %v318 = vld [vmem:[%s317] sm:$0xff]
    %v319 = vld [vmem:[%s317 + $0x8] sm:$0xff]
    %v320 = vmul.f32 %v315, %v318
    %v321 = vmul.f32 %v313, %v319
    %v322 = vmul.f32 %v316, %v318
    %v323 = vmul.f32 %v314, %v319
    %v324 = vadd.f32 %v300, %v320
    %v325 = vadd.f32 %v301, %v321
    %v326 = vadd.f32 %v302, %v322
    %v327 = vadd.f32 %v303, %v323
    %s328 = scalar_lea.vmem [#allocation2], 64
    %v329 = vld [vmem:[%s328] sm:$0xff]
    %v330 = vld [vmem:[%s328 + $0x8] sm:$0xff]
    %v331 = vmul.f32 %v231, %v329
    %v332 = vmul.f32 %v232, %v330
    %v333 = vmul.f32 %v233, %v329
    %v334 = vmul.f32 %v234, %v330
    %v335 = vadd.f32 %v324, %v331
    %v336 = vadd.f32 %v325, %v332
    %v337 = vadd.f32 %v326, %v333
    %v338 = vadd.f32 %v327, %v334
    %339 = vrot.lane.b32.xlu0 %v231, 127
    %v340 = vpop.permute.xlu0 %339
    %341 = vrot.lane.b32.xlu0 %v233, 127
    %v342 = vpop.permute.xlu0 %341
    %343 = vrot.lane.b32.xlu0 %v232, 127
    %v344 = vpop.permute.xlu0 %343
    %345 = vrot.lane.b32.xlu0 %v234, 127
    %v346 = vpop.permute.xlu0 %345
    %vm347 = vcmp.lt.s32.totalorder %v244, 127
    %v348 = vsel %vm347, %v340, %v344
    %v349 = vsel %vm347, %v342, %v346
    %v350 = vsel %vm347, %v344, %v340
    %v351 = vsel %vm347, %v346, %v342
    %s352 = scalar_lea.vmem [#allocation2], 80
    %v353 = vld [vmem:[%s352] sm:$0xff]
    %v354 = vld [vmem:[%s352 + $0x8] sm:$0xff]
    %v355 = vmul.f32 %v348, %v353
    %v356 = vmul.f32 %v350, %v354
    %v357 = vmul.f32 %v349, %v353
    %v358 = vmul.f32 %v351, %v354
    %v359 = vadd.f32 %v335, %v355
    %v360 = vadd.f32 %v336, %v356
    %v361 = vadd.f32 %v337, %v357
    %v362 = vadd.f32 %v338, %v358
    %363 = vrot.lane.b32.xlu0 %v231, 113
    %v364 = vpop.permute.xlu0 %363
    %365 = vrot.lane.b32.xlu0 %v233, 113
    %v366 = vpop.permute.xlu0 %365
    %367 = vrot.lane.b32.xlu0 %v232, 113
    %v368 = vpop.permute.xlu0 %367
    %369 = vrot.lane.b32.xlu0 %v234, 113
    %v370 = vpop.permute.xlu0 %369
    %vm371 = vcmp.lt.s32.totalorder %v244, 113
    %v372 = vsel %vm371, %v364, %v368
    %v373 = vsel %vm371, %v366, %v370
    %v374 = vsel %vm371, %v368, %v364
    %v375 = vsel %vm371, %v370, %v366
    %s376 = scalar_lea.vmem [#allocation2], 96
    %v377 = vld [vmem:[%s376] sm:$0xff]
    %v378 = vld [vmem:[%s376 + $0x8] sm:$0xff]
    %v379 = vmul.f32 %v372, %v377
    %v380 = vmul.f32 %v374, %v378
    %v381 = vmul.f32 %v373, %v377
    %v382 = vmul.f32 %v375, %v378
    %v383 = vadd.f32 %v359, %v379
    %v384 = vadd.f32 %v360, %v380
    %v385 = vadd.f32 %v361, %v381
    %v386 = vadd.f32 %v362, %v382
    %387 = vrot.lane.b32.xlu0 %v231, 112
    %v388 = vpop.permute.xlu0 %387
    %389 = vrot.lane.b32.xlu0 %v233, 112
    %v390 = vpop.permute.xlu0 %389
    %391 = vrot.lane.b32.xlu0 %v232, 112
    %v392 = vpop.permute.xlu0 %391
    %393 = vrot.lane.b32.xlu0 %v234, 112
    %v394 = vpop.permute.xlu0 %393
    %vm395 = vcmp.lt.s32.totalorder %v244, 112
    %v396 = vsel %vm395, %v388, %v392
    %v397 = vsel %vm395, %v390, %v394
    %v398 = vsel %vm395, %v392, %v388
    %v399 = vsel %vm395, %v394, %v390
    %s400 = scalar_lea.vmem [#allocation2], 112
    %v401 = vld [vmem:[%s400] sm:$0xff]
    %v402 = vld [vmem:[%s400 + $0x8] sm:$0xff]
    %v403 = vmul.f32 %v396, %v401
    %v404 = vmul.f32 %v398, %v402
    %v405 = vmul.f32 %v397, %v401
    %v406 = vmul.f32 %v399, %v402
    %v407 = vadd.f32 %v383, %v403
    %v408 = vadd.f32 %v384, %v404
    %v409 = vadd.f32 %v385, %v405
    %v410 = vadd.f32 %v386, %v406
    %411 = vrot.lane.b32.xlu0 %v231, 111
    %v412 = vpop.permute.xlu0 %411
    %413 = vrot.lane.b32.xlu0 %v233, 111
    %v414 = vpop.permute.xlu0 %413
    %415 = vrot.lane.b32.xlu0 %v232, 111
    %v416 = vpop.permute.xlu0 %415
    %417 = vrot.lane.b32.xlu0 %v234, 111
    %v418 = vpop.permute.xlu0 %417
    %vm419 = vcmp.lt.s32.totalorder %v244, 111
    %v420 = vsel %vm419, %v412, %v416
    %v421 = vsel %vm419, %v414, %v418
    %v422 = vsel %vm419, %v416, %v412
    %v423 = vsel %vm419, %v418, %v414
    %s424 = scalar_lea.vmem [#allocation2], 128
    %v425 = vld [vmem:[%s424] sm:$0xff]
    %v426 = vld [vmem:[%s424 + $0x8] sm:$0xff]
    %v427 = vmul.f32 %v420, %v425
    %v428 = vmul.f32 %v422, %v426
    %v429 = vmul.f32 %v421, %v425
    %v430 = vmul.f32 %v423, %v426
    %v431 = vadd.f32 %v407, %v427
    %v432 = vadd.f32 %v408, %v428
    %v433 = vadd.f32 %v409, %v429
    %v434 = vadd.f32 %v410, %v430
    %v435 = vld [vmem:[%s3] sm:$0xff]
    %v436 = vld [vmem:[%s3 + $0x8] sm:$0xff]
    %v437 = vadd.f32 %v431, %v435
    %v438 = vadd.f32 %v432, %v436
    %v439 = vadd.f32 %v433, %v435
    %v440 = vadd.f32 %v434, %v436
    %v441 = vmax.f32 %v437, 0.0
    %v442 = vmax.f32 %v438, 0.0
    %v443 = vmax.f32 %v439, 0.0
    %v444 = vmax.f32 %v440, 0.0
    %445 = vst [vmem:[#allocation5] sm:$0xff] %v441
    %446 = vst [vmem:[#allocation5 + $0x8] sm:$0xff] %v442
    %447 = vst [vmem:[#allocation5 + $0x10] sm:$0xff] %v443
    %448 = vst [vmem:[#allocation5 + $0x18] sm:$0xff] %v444
    // Predicated region
    $region22: #{tpu_custom_call.1} parent=1 // pred_check
      _
    $region23: #{tpu_custom_call.1} parent=1 // pred_check_branch
      %450 = sbr.rel (0) target = $region25
    $region24: #{tpu_custom_call.1} parent=1 // pred_region
      %s452 = ssub.s32 512, 512
      %453 = vsyncadd [#allocation4], %s452
      %s454 = sshll.u32 [#allocation5], 4
      %s455 = int_to_ptr.vmem [resolvable:$true] %s454
      %460 = dma.vmem_to_hbm [thread:$0]  %s455, 512, %s4, [#allocation4], 256, 256, 16
    $region25: #{tpu_custom_call.1} parent=1 // pred_fallthru
      _
    // Predicated region
    $region26: #{tpu_custom_call.1} parent=1 // pred_check
      _
    $region27: #{tpu_custom_call.1} parent=1 // pred_check_branch
      %462 = sbr.rel (0) target = $region29
    $region28: #{tpu_custom_call.1} parent=1 // pred_region
      %463 = dma.done [#allocation4], 512
    $region29: #{tpu_custom_call.1} parent=1 // pred_fallthru
      _
    %464 = vsyncpa [#allocation3], 1
    %465 = vsyncpa [#allocation4], 1

</llo_original>
